<compile_context>
chip_gen: v6e
topology: v6e:2x2x1
jax: 0.10.0
libtpu: 0.0.40
codegen_flags: <defaults>
</compile_context>

<pallas_src>
import jax

jax.config.update("jax_enable_x64", True)  # required to hold the int64 result

import jax.numpy as jnp
from jax.experimental import pallas as pl
from jax.experimental.pallas import tpu as pltpu


# Below this many elements (or for lane-thin arrays) pallas_call launch
# overhead + a separate packing fusion dominate; XLA's fused convert already
# hits the HBM roofline (read 4 B, write 8 B per element).
_PALLAS_MIN_ELEMS = 1 << 20


def _sign_plane_kernel(x_ref, hi_ref):
    # Sign-extension word of int64(x): arithmetic >> 31 is 0 for x >= 0 and
    # -1 for x < 0.  Stored as int8 to cut writeback 4x vs int32.
    hi_ref[...] = (x_ref[...] >> jnp.int32(31)).astype(jnp.int8)


def _chip_params():
    """Per-generation (block element budget, scoped VMEM limit, dual-TC?)."""
    kind = ""
    try:
        kind = jax.devices()[0].device_kind.lower()
    except Exception:  # defensive: never let detection break the kernel
        pass
    if "v6" in kind:
        # v6e: 128 MiB physical VMEM, 1 TC.  8 MiB int32 input blocks
        # double-buffered (plus 2 MiB int8 output) fit comfortably.
        return 1024 * 2048, 64 * 1024 * 1024, False
    if "v5" in kind:
        # v5e: 1 TC, 16 MiB default scoped VMEM -> raise limit, 4 MiB blocks.
        return 512 * 2048, 32 * 1024 * 1024, False
    # v7x (and unknown chips): only 64 MiB physical VMEM -> keep 4 MiB input
    # blocks and the 32 MiB scoped limit; v7x has 2 TensorCores per chip.
    return 512 * 2048, 32 * 1024 * 1024, ("7" in kind)


def _choose_tiles(M, N, budget_elems, two_tc):
    """Large, lane-dense tiles; row blocks multiple-of-32 (int8 tiling)."""
    tn = N if N <= 2048 else 2048              # full dim or wide multiple of 128
    tm = min(M, max(32, budget_elems // tn))
    if tm != M:
        tm = max(32, (tm // 32) * 32)          # int8 native tile is (32, 128)
    # If the whole array is a single block, split rows so both TensorCores of
    # a dual-TC chip (v7x) get work.  On 1-TC parts this would only add a
    # serial grid step, so it is gated.
    if two_tc and pl.cdiv(M, tm) == 1 and pl.cdiv(N, tn) == 1 and M > 32:
        tm = max(32, ((pl.cdiv(M, 2) + 31) // 32) * 32)
    return tm, tn


def i32_to_i64(x, *, force_pallas=False):
    """Emulated int32 -> int64 cast of a 2-D int32 array (x.to(torch.int64))."""
    assert x.dtype == jnp.int32, x.dtype
    assert x.ndim == 2, x.shape
    M, N = x.shape

    # Small / lane-thin bypass: avoids launch overhead and masked (vst.msk)
    # partial stores when N < 128.
    if not force_pallas and (M * N < _PALLAS_MIN_ELEMS or N < 128):
        return x.astype(jnp.int64)

    budget_elems, vmem_limit, two_tc = _chip_params()
    tm, tn = _choose_tiles(M, N, budget_elems, two_tc)
    grid = (pl.cdiv(M, tm), pl.cdiv(N, tn))

    hi = pl.pallas_call(
        _sign_plane_kernel,
        out_shape=jax.ShapeDtypeStruct((M, N), jnp.int8),
        grid=grid,
        in_specs=[pl.BlockSpec((tm, tn), lambda i, j: (i, j))],
        out_specs=pl.BlockSpec((tm, tn), lambda i, j: (i, j)),
        compiler_params=pltpu.CompilerParams(
            dimension_semantics=("parallel", "parallel"),
            vmem_limit_bytes=vmem_limit,
        ),
    )(x)

    # Packing runs as a single fused XLA elementwise op: read x (4 B) + hi
    # (1 B), write y (8 B).  Mosaic has no 64-bit vector lanes, so this stays
    # outside the kernel.
    lo64 = x.astype(jnp.uint32).astype(jnp.int64)  # zero-extended low word
    hi64 = hi.astype(jnp.int64) << 32              # sign word shifted up
    return hi64 | lo64


if __name__ == "__main__":
    key = jax.random.PRNGKey(0)

    def make_input(k, m, n):
        a = jax.random.randint(k, (m, n), minval=-1_000_000, maxval=1_000_000,
                               dtype=jnp.int32)
        # Deterministically pin sign-extension edge cases.
        a = a.at[0, 0].set(jnp.int32(-(2 ** 31)))   # INT32_MIN
        a = a.at[0, 1].set(jnp.int32(2 ** 31 - 1))  # INT32_MAX
        a = a.at[0, 2].set(jnp.int32(-1))
        a = a.at[0, 3].set(jnp.int32(0))
        return a

    k1, k2, k3 = jax.random.split(key, 3)

    # 1) Tiny shape (consistent with the [-1, -1] int32 annotation): dispatch
    #    takes the XLA fast path.
    x_small = make_input(k1, 16, 256)
    y_small = jax.block_until_ready(i32_to_i64(x_small))
    assert y_small.dtype == jnp.int64, y_small.dtype
    assert y_small.shape == (16, 256), y_small.shape
    assert bool(jnp.all(y_small == x_small.astype(jnp.int64))), "bypass mismatch"

    # 2) Force the Pallas path on a small, block-aligned shape.
    x_a = make_input(k2, 256, 512)
    y_a = jax.block_until_ready(i32_to_i64(x_a, force_pallas=True))
    assert y_a.dtype == jnp.int64, y_a.dtype
    assert y_a.shape == (256, 512), y_a.shape
    assert bool(jnp.all(y_a == x_a.astype(jnp.int64))), "pallas mismatch"

    # 3) Ragged column count exercises Pallas edge masking on the kernel path.
    x_b = make_input(k3, 64, 2304)
    y_b = jax.block_until_ready(i32_to_i64(x_b, force_pallas=True))
    assert bool(jnp.all(y_b == x_b.astype(jnp.int64))), "ragged pallas mismatch"

    print("KERNEL_OK")
</pallas_src>

<mosaic_0001>
module attributes {stable_mosaic.version = 11 : i64} {
  func.func @_sign_plane_kernel(%arg0: i32, %arg1: i32, %arg2: memref<256x512xi32, #tpu.memory_space<vmem>>, %arg3: memref<256x512xi8, #tpu.memory_space<vmem>>) attributes {dimension_semantics = [#tpu.dimension_semantics<parallel>, #tpu.dimension_semantics<parallel>], iteration_bounds = array<i64: 1, 1>, scalar_prefetch = 0 : i64, scratch_operands = 0 : i64, tpu.core_type = #tpu.core_type<tc>, window_params = [{transform_indices = @transform_0, window_bounds = array<i64: 256, 512>}, {transform_indices = @transform_1, window_bounds = array<i64: 256, 512>}]} {
    %c0 = arith.constant 0 : index
    %c0_0 = arith.constant 0 : index
    %0 = vector.load %arg2[%c0, %c0_0] : memref<256x512xi32, #tpu.memory_space<vmem>>, vector<256x512xi32>
    %c31_i32 = arith.constant 31 : i32
    %1 = vector.broadcast %c31_i32 : i32 to vector<256x512xi32>
    %2 = arith.shrsi %0, %1 : vector<256x512xi32>
    %3 = arith.trunci %2 : vector<256x512xi32> to vector<256x512xi8>
    %c0_1 = arith.constant 0 : index
    %c0_2 = arith.constant 0 : index
    %4 = vector.load %arg3[%c0_1, %c0_2] : memref<256x512xi8, #tpu.memory_space<vmem>>, vector<256x512xi8>
    tpu.vector_store %arg3[%c0_1, %c0_2], %3 {strides = array<i32>} : memref<256x512xi8, #tpu.memory_space<vmem>>, vector<256x512xi8>,
    return
  }
  func.func @transform_0(%arg0: i32, %arg1: i32) -> (i32, i32) {
    %c0_i32 = arith.constant 0 : i32
    return %arg0, %arg1 : i32, i32
  }
  func.func @transform_1(%arg0: i32, %arg1: i32) -> (i32, i32) {
    %c0_i32 = arith.constant 0 : i32
    return %arg0, %arg1 : i32, i32
  }
}

</mosaic_0001>

<llo_original>
// kernel: tpu_custom_call.1
$region0: #{tpu_custom_call.1}
  #allocation0 [shape = 'u32[]', space=smem, size = 0x4, offset = 0x4, fixed_abs, tag = 'smem constant byte address 0x4 - core index']
  #allocation1 [shape = 'u32[144,128]{1,0:T(1,128)}', space=vmem, size = 0x12000, scoped, tag = 'internal scratch']
  %s0 = inlined_call_operand.hbm [shape: s32[256,512], index: 0, kind: input, shape index: {}]
  %s1 = inlined_call_operand.hbm [shape: s8[256,512], index: 1, kind: output, shape index: {}]
  %s2 = sld [smem:[#allocation0]]
  $region18: #{tpu_custom_call.1} parent=0
    _
  %s4 = ssub.s32 1, %s2
  %s5 = scalar_select 0, %s4, %s2
  $region1: #{tpu_custom_call.1} parent=0
    #allocation2 [shape = 'u8[524288]{0}', space=vmem, size = 0x80000, scoped, tag = 'input window, operand 0, single buffered']
    #allocation3 [shape = 's32[1]{0}', space=sflag, size = 0x4, scoped, tag = 'scoped memory for tpu_custom_call.1']
    #allocation4 [shape = 's32[1]{0}', space=sflag, size = 0x4, scoped, tag = 'scoped memory for tpu_custom_call.1']
    #allocation5 [shape = 'u8[131072]{0}', space=vmem, size = 0x20000, scoped, tag = 'output window, operand 0, single buffered']
    %6 = vsyncpa [#allocation3], 0
    %7 = vsyncpa [#allocation4], 0
    // Predicated region
    $region2: #{tpu_custom_call.1} parent=1 // pred_check
      _
    $region3: #{tpu_custom_call.1} parent=1 // pred_check_branch
      %9 = sbr.rel (0) target = $region5
    $region4: #{tpu_custom_call.1} parent=1 // pred_region
      %s11 = ssub.s32 16384, 16384
      %12 = vsyncadd [#allocation3], %s11
      %s13 = sshll.u32 [#allocation2], 4
      %s14 = int_to_ptr.vmem [resolvable:$true] %s13
      %19 = dma.hbm_to_vmem [thread:$0]  %s0, 16384, %s14, [#allocation3], 512, 512, 32
    $region5: #{tpu_custom_call.1} parent=1 // pred_fallthru
      _
    // Predicated region
    $region6: #{tpu_custom_call.1} parent=1 // pred_check
      _
    $region7: #{tpu_custom_call.1} parent=1 // pred_check_branch
      %21 = sbr.rel (0) target = $region9
    $region8: #{tpu_custom_call.1} parent=1 // pred_region
      %22 = dma.done [#allocation3], 16384
    $region9: #{tpu_custom_call.1} parent=1 // pred_fallthru
      _
    %v23 = vld [vmem:[#allocation2] sm:$0xff]
    %v24 = vld [vmem:[#allocation2 + $0x8] sm:$0xff]
    %v25 = vld [vmem:[#allocation2 + $0x10] sm:$0xff]
    %v26 = vld [vmem:[#allocation2 + $0x18] sm:$0xff]
    %v27 = vld [vmem:[#allocation2 + $0x20] sm:$0xff]
    %v28 = vld [vmem:[#allocation2 + $0x28] sm:$0xff]
    %v29 = vld [vmem:[#allocation2 + $0x30] sm:$0xff]
    %v30 = vld [vmem:[#allocation2 + $0x38] sm:$0xff]
    %v31 = vld [vmem:[#allocation2 + $0x40] sm:$0xff]
    %v32 = vld [vmem:[#allocation2 + $0x48] sm:$0xff]
    %v33 = vld [vmem:[#allocation2 + $0x50] sm:$0xff]
    %v34 = vld [vmem:[#allocation2 + $0x58] sm:$0xff]
    %v35 = vld [vmem:[#allocation2 + $0x60] sm:$0xff]
    %v36 = vld [vmem:[#allocation2 + $0x68] sm:$0xff]
    %v37 = vld [vmem:[#allocation2 + $0x70] sm:$0xff]
    %v38 = vld [vmem:[#allocation2 + $0x78] sm:$0xff]
    %v39 = vld [vmem:[#allocation2 + $0x80] sm:$0xff]
    %v40 = vld [vmem:[#allocation2 + $0x88] sm:$0xff]
    %v41 = vld [vmem:[#allocation2 + $0x90] sm:$0xff]
    %v42 = vld [vmem:[#allocation2 + $0x98] sm:$0xff]
    %v43 = vld [vmem:[#allocation2 + $0xa0] sm:$0xff]
    %v44 = vld [vmem:[#allocation2 + $0xa8] sm:$0xff]
    %v45 = vld [vmem:[#allocation2 + $0xb0] sm:$0xff]
    %v46 = vld [vmem:[#allocation2 + $0xb8] sm:$0xff]
    %v47 = vld [vmem:[#allocation2 + $0xc0] sm:$0xff]
    %v48 = vld [vmem:[#allocation2 + $0xc8] sm:$0xff]
    %v49 = vld [vmem:[#allocation2 + $0xd0] sm:$0xff]
    %v50 = vld [vmem:[#allocation2 + $0xd8] sm:$0xff]
    %v51 = vld [vmem:[#allocation2 + $0xe0] sm:$0xff]
    %v52 = vld [vmem:[#allocation2 + $0xe8] sm:$0xff]
    %v53 = vld [vmem:[#allocation2 + $0xf0] sm:$0xff]
    %v54 = vld [vmem:[#allocation2 + $0xf8] sm:$0xff]
    %v55 = vld [vmem:[#allocation2 + $0x100] sm:$0xff]
    %v56 = vld [vmem:[#allocation2 + $0x108] sm:$0xff]
    %v57 = vld [vmem:[#allocation2 + $0x110] sm:$0xff]
    %v58 = vld [vmem:[#allocation2 + $0x118] sm:$0xff]
    %v59 = vld [vmem:[#allocation2 + $0x120] sm:$0xff]
    %v60 = vld [vmem:[#allocation2 + $0x128] sm:$0xff]
    %v61 = vld [vmem:[#allocation2 + $0x130] sm:$0xff]
    %v62 = vld [vmem:[#allocation2 + $0x138] sm:$0xff]
    %v63 = vld [vmem:[#allocation2 + $0x140] sm:$0xff]
    %v64 = vld [vmem:[#allocation2 + $0x148] sm:$0xff]
    %v65 = vld [vmem:[#allocation2 + $0x150] sm:$0xff]
    %v66 = vld [vmem:[#allocation2 + $0x158] sm:$0xff]
    %v67 = vld [vmem:[#allocation2 + $0x160] sm:$0xff]
    %v68 = vld [vmem:[#allocation2 + $0x168] sm:$0xff]
    %v69 = vld [vmem:[#allocation2 + $0x170] sm:$0xff]
    %v70 = vld [vmem:[#allocation2 + $0x178] sm:$0xff]
    %v71 = vld [vmem:[#allocation2 + $0x180] sm:$0xff]
    %v72 = vld [vmem:[#allocation2 + $0x188] sm:$0xff]
    %v73 = vld [vmem:[#allocation2 + $0x190] sm:$0xff]
    %v74 = vld [vmem:[#allocation2 + $0x198] sm:$0xff]
    %v75 = vld [vmem:[#allocation2 + $0x1a0] sm:$0xff]
    %v76 = vld [vmem:[#allocation2 + $0x1a8] sm:$0xff]
    %v77 = vld [vmem:[#allocation2 + $0x1b0] sm:$0xff]
    %v78 = vld [vmem:[#allocation2 + $0x1b8] sm:$0xff]
    %v79 = vld [vmem:[#allocation2 + $0x1c0] sm:$0xff]
    %v80 = vld [vmem:[#allocation2 + $0x1c8] sm:$0xff]
    %v81 = vld [vmem:[#allocation2 + $0x1d0] sm:$0xff]
    %v82 = vld [vmem:[#allocation2 + $0x1d8] sm:$0xff]
    %v83 = vld [vmem:[#allocation2 + $0x1e0] sm:$0xff]
    %v84 = vld [vmem:[#allocation2 + $0x1e8] sm:$0xff]
    %v85 = vld [vmem:[#allocation2 + $0x1f0] sm:$0xff]
    %v86 = vld [vmem:[#allocation2 + $0x1f8] sm:$0xff]
    %v87 = vld [vmem:[#allocation2 + $0x200] sm:$0xff]
    %v88 = vld [vmem:[#allocation2 + $0x208] sm:$0xff]
    %v89 = vld [vmem:[#allocation2 + $0x210] sm:$0xff]
    %v90 = vld [vmem:[#allocation2 + $0x218] sm:$0xff]
    %v91 = vld [vmem:[#allocation2 + $0x220] sm:$0xff]
    %v92 = vld [vmem:[#allocation2 + $0x228] sm:$0xff]
    %v93 = vld [vmem:[#allocation2 + $0x230] sm:$0xff]
    %v94 = vld [vmem:[#allocation2 + $0x238] sm:$0xff]
    %v95 = vld [vmem:[#allocation2 + $0x240] sm:$0xff]
    %v96 = vld [vmem:[#allocation2 + $0x248] sm:$0xff]
    %v97 = vld [vmem:[#allocation2 + $0x250] sm:$0xff]
    %v98 = vld [vmem:[#allocation2 + $0x258] sm:$0xff]
    %v99 = vld [vmem:[#allocation2 + $0x260] sm:$0xff]
    %v100 = vld [vmem:[#allocation2 + $0x268] sm:$0xff]
    %v101 = vld [vmem:[#allocation2 + $0x270] sm:$0xff]
    %v102 = vld [vmem:[#allocation2 + $0x278] sm:$0xff]
    %v103 = vld [vmem:[#allocation2 + $0x280] sm:$0xff]
    %v104 = vld [vmem:[#allocation2 + $0x288] sm:$0xff]
    %v105 = vld [vmem:[#allocation2 + $0x290] sm:$0xff]
    %v106 = vld [vmem:[#allocation2 + $0x298] sm:$0xff]
    %v107 = vld [vmem:[#allocation2 + $0x2a0] sm:$0xff]
    %v108 = vld [vmem:[#allocation2 + $0x2a8] sm:$0xff]
    %v109 = vld [vmem:[#allocation2 + $0x2b0] sm:$0xff]
    %v110 = vld [vmem:[#allocation2 + $0x2b8] sm:$0xff]
    %v111 = vld [vmem:[#allocation2 + $0x2c0] sm:$0xff]
    %v112 = vld [vmem:[#allocation2 + $0x2c8] sm:$0xff]
    %v113 = vld [vmem:[#allocation2 + $0x2d0] sm:$0xff]
    %v114 = vld [vmem:[#allocation2 + $0x2d8] sm:$0xff]
    %v115 = vld [vmem:[#allocation2 + $0x2e0] sm:$0xff]
    %v116 = vld [vmem:[#allocation2 + $0x2e8] sm:$0xff]
    %v117 = vld [vmem:[#allocation2 + $0x2f0] sm:$0xff]
    %v118 = vld [vmem:[#allocation2 + $0x2f8] sm:$0xff]
    %v119 = vld [vmem:[#allocation2 + $0x300] sm:$0xff]
    %v120 = vld [vmem:[#allocation2 + $0x308] sm:$0xff]
    %v121 = vld [vmem:[#allocation2 + $0x310] sm:$0xff]
    %v122 = vld [vmem:[#allocation2 + $0x318] sm:$0xff]
    %v123 = vld [vmem:[#allocation2 + $0x320] sm:$0xff]
    %v124 = vld [vmem:[#allocation2 + $0x328] sm:$0xff]
    %v125 = vld [vmem:[#allocation2 + $0x330] sm:$0xff]
    %v126 = vld [vmem:[#allocation2 + $0x338] sm:$0xff]
    %v127 = vld [vmem:[#allocation2 + $0x340] sm:$0xff]
    %v128 = vld [vmem:[#allocation2 + $0x348] sm:$0xff]
    %v129 = vld [vmem:[#allocation2 + $0x350] sm:$0xff]
    %v130 = vld [vmem:[#allocation2 + $0x358] sm:$0xff]
    %v131 = vld [vmem:[#allocation2 + $0x360] sm:$0xff]
    %v132 = vld [vmem:[#allocation2 + $0x368] sm:$0xff]
    %v133 = vld [vmem:[#allocation2 + $0x370] sm:$0xff]
    %v134 = vld [vmem:[#allocation2 + $0x378] sm:$0xff]
    %v135 = vld [vmem:[#allocation2 + $0x380] sm:$0xff]
    %v136 = vld [vmem:[#allocation2 + $0x388] sm:$0xff]
    %v137 = vld [vmem:[#allocation2 + $0x390] sm:$0xff]
    %v138 = vld [vmem:[#allocation2 + $0x398] sm:$0xff]
    %v139 = vld [vmem:[#allocation2 + $0x3a0] sm:$0xff]
    %v140 = vld [vmem:[#allocation2 + $0x3a8] sm:$0xff]
    %v141 = vld [vmem:[#allocation2 + $0x3b0] sm:$0xff]
    %v142 = vld [vmem:[#allocation2 + $0x3b8] sm:$0xff]
    %v143 = vld [vmem:[#allocation2 + $0x3c0] sm:$0xff]
    %v144 = vld [vmem:[#allocation2 + $0x3c8] sm:$0xff]
    %v145 = vld [vmem:[#allocation2 + $0x3d0] sm:$0xff]
    %v146 = vld [vmem:[#allocation2 + $0x3d8] sm:$0xff]
    %v147 = vld [vmem:[#allocation2 + $0x3e0] sm:$0xff]
    %v148 = vld [vmem:[#allocation2 + $0x3e8] sm:$0xff]
    %v149 = vld [vmem:[#allocation2 + $0x3f0] sm:$0xff]
    %v150 = vld [vmem:[#allocation2 + $0x3f8] sm:$0xff]
    %v151 = vshra.s32 %v23, 31
    %v152 = vshra.s32 %v24, 31
    %v153 = vshra.s32 %v25, 31
    %v154 = vshra.s32 %v26, 31
    %v155 = vshra.s32 %v27, 31
    %v156 = vshra.s32 %v28, 31
    %v157 = vshra.s32 %v29, 31
    %v158 = vshra.s32 %v30, 31
    %v159 = vshra.s32 %v31, 31
    %v160 = vshra.s32 %v32, 31
    %v161 = vshra.s32 %v33, 31
    %v162 = vshra.s32 %v34, 31
    %v163 = vshra.s32 %v35, 31
    %v164 = vshra.s32 %v36, 31
    %v165 = vshra.s32 %v37, 31
    %v166 = vshra.s32 %v38, 31
    %v167 = vshra.s32 %v39, 31
    %v168 = vshra.s32 %v40, 31
    %v169 = vshra.s32 %v41, 31
    %v170 = vshra.s32 %v42, 31
    %v171 = vshra.s32 %v43, 31
    %v172 = vshra.s32 %v44, 31
    %v173 = vshra.s32 %v45, 31
    %v174 = vshra.s32 %v46, 31
    %v175 = vshra.s32 %v47, 31
    %v176 = vshra.s32 %v48, 31
    %v177 = vshra.s32 %v49, 31
    %v178 = vshra.s32 %v50, 31
    %v179 = vshra.s32 %v51, 31
    %v180 = vshra.s32 %v52, 31
    %v181 = vshra.s32 %v53, 31
    %v182 = vshra.s32 %v54, 31
    %v183 = vshra.s32 %v55, 31
    %v184 = vshra.s32 %v56, 31
    %v185 = vshra.s32 %v57, 31
    %v186 = vshra.s32 %v58, 31
    %v187 = vshra.s32 %v59, 31
    %v188 = vshra.s32 %v60, 31
    %v189 = vshra.s32 %v61, 31
    %v190 = vshra.s32 %v62, 31
    %v191 = vshra.s32 %v63, 31
    %v192 = vshra.s32 %v64, 31
    %v193 = vshra.s32 %v65, 31
    %v194 = vshra.s32 %v66, 31
    %v195 = vshra.s32 %v67, 31
    %v196 = vshra.s32 %v68, 31
    %v197 = vshra.s32 %v69, 31
    %v198 = vshra.s32 %v70, 31
    %v199 = vshra.s32 %v71, 31
    %v200 = vshra.s32 %v72, 31
    %v201 = vshra.s32 %v73, 31
    %v202 = vshra.s32 %v74, 31
    %v203 = vshra.s32 %v75, 31
    %v204 = vshra.s32 %v76, 31
    %v205 = vshra.s32 %v77, 31
    %v206 = vshra.s32 %v78, 31
    %v207 = vshra.s32 %v79, 31
    %v208 = vshra.s32 %v80, 31
    %v209 = vshra.s32 %v81, 31
    %v210 = vshra.s32 %v82, 31
    %v211 = vshra.s32 %v83, 31
    %v212 = vshra.s32 %v84, 31
    %v213 = vshra.s32 %v85, 31
    %v214 = vshra.s32 %v86, 31
    %v215 = vshra.s32 %v87, 31
    %v216 = vshra.s32 %v88, 31
    %v217 = vshra.s32 %v89, 31
    %v218 = vshra.s32 %v90, 31
    %v219 = vshra.s32 %v91, 31
    %v220 = vshra.s32 %v92, 31
    %v221 = vshra.s32 %v93, 31
    %v222 = vshra.s32 %v94, 31
    %v223 = vshra.s32 %v95, 31
    %v224 = vshra.s32 %v96, 31
    %v225 = vshra.s32 %v97, 31
    %v226 = vshra.s32 %v98, 31
    %v227 = vshra.s32 %v99, 31
    %v228 = vshra.s32 %v100, 31
    %v229 = vshra.s32 %v101, 31
    %v230 = vshra.s32 %v102, 31
    %v231 = vshra.s32 %v103, 31
    %v232 = vshra.s32 %v104, 31
    %v233 = vshra.s32 %v105, 31
    %v234 = vshra.s32 %v106, 31
    %v235 = vshra.s32 %v107, 31
    %v236 = vshra.s32 %v108, 31
    %v237 = vshra.s32 %v109, 31
    %v238 = vshra.s32 %v110, 31
    %v239 = vshra.s32 %v111, 31
    %v240 = vshra.s32 %v112, 31
    %v241 = vshra.s32 %v113, 31
    %v242 = vshra.s32 %v114, 31
    %v243 = vshra.s32 %v115, 31
    %v244 = vshra.s32 %v116, 31
    %v245 = vshra.s32 %v117, 31
    %v246 = vshra.s32 %v118, 31
    %v247 = vshra.s32 %v119, 31
    %v248 = vshra.s32 %v120, 31
    %v249 = vshra.s32 %v121, 31
    %v250 = vshra.s32 %v122, 31
    %v251 = vshra.s32 %v123, 31
    %v252 = vshra.s32 %v124, 31
    %v253 = vshra.s32 %v125, 31
    %v254 = vshra.s32 %v126, 31
    %v255 = vshra.s32 %v127, 31
    %v256 = vshra.s32 %v128, 31
    %v257 = vshra.s32 %v129, 31
    %v258 = vshra.s32 %v130, 31
    %v259 = vshra.s32 %v131, 31
    %v260 = vshra.s32 %v132, 31
    %v261 = vshra.s32 %v133, 31
    %v262 = vshra.s32 %v134, 31
    %v263 = vshra.s32 %v135, 31
    %v264 = vshra.s32 %v136, 31
    %v265 = vshra.s32 %v137, 31
    %v266 = vshra.s32 %v138, 31
    %v267 = vshra.s32 %v139, 31
    %v268 = vshra.s32 %v140, 31
    %v269 = vshra.s32 %v141, 31
    %v270 = vshra.s32 %v142, 31
    %v271 = vshra.s32 %v143, 31
    %v272 = vshra.s32 %v144, 31
    %v273 = vshra.s32 %v145, 31
    %v274 = vshra.s32 %v146, 31
    %v275 = vshra.s32 %v147, 31
    %v276 = vshra.s32 %v148, 31
    %v277 = vshra.s32 %v149, 31
    %v278 = vshra.s32 %v150, 31
    %v279 = vpack.c.b16 %v155, %v151
    %v280 = vpack.c.b16 %v163, %v159
    %v281 = vpack.c.b8 %v280, %v279
    %v282 = vpack.c.b16 %v156, %v152
    %v283 = vpack.c.b16 %v164, %v160
    %v284 = vpack.c.b8 %v283, %v282
    %v285 = vpack.c.b16 %v157, %v153
    %v286 = vpack.c.b16 %v165, %v161
    %v287 = vpack.c.b8 %v286, %v285
    %v288 = vpack.c.b16 %v158, %v154
    %v289 = vpack.c.b16 %v166, %v162
    %v290 = vpack.c.b8 %v289, %v288
    %v291 = vpack.c.b16 %v171, %v167
    %v292 = vpack.c.b16 %v179, %v175
    %v293 = vpack.c.b8 %v292, %v291
    %v294 = vpack.c.b16 %v172, %v168
    %v295 = vpack.c.b16 %v180, %v176
    %v296 = vpack.c.b8 %v295, %v294
    %v297 = vpack.c.b16 %v173, %v169
    %v298 = vpack.c.b16 %v181, %v177
    %v299 = vpack.c.b8 %v298, %v297
    %v300 = vpack.c.b16 %v174, %v170
    %v301 = vpack.c.b16 %v182, %v178
    %v302 = vpack.c.b8 %v301, %v300
    %v303 = vpack.c.b16 %v187, %v183
    %v304 = vpack.c.b16 %v195, %v191
    %v305 = vpack.c.b8 %v304, %v303
    %v306 = vpack.c.b16 %v188, %v184
    %v307 = vpack.c.b16 %v196, %v192
    %v308 = vpack.c.b8 %v307, %v306
    %v309 = vpack.c.b16 %v189, %v185
    %v310 = vpack.c.b16 %v197, %v193
    %v311 = vpack.c.b8 %v310, %v309
    %v312 = vpack.c.b16 %v190, %v186
    %v313 = vpack.c.b16 %v198, %v194
    %v314 = vpack.c.b8 %v313, %v312
    %v315 = vpack.c.b16 %v203, %v199
    %v316 = vpack.c.b16 %v211, %v207
    %v317 = vpack.c.b8 %v316, %v315
    %v318 = vpack.c.b16 %v204, %v200
    %v319 = vpack.c.b16 %v212, %v208
    %v320 = vpack.c.b8 %v319, %v318
    %v321 = vpack.c.b16 %v205, %v201
    %v322 = vpack.c.b16 %v213, %v209
    %v323 = vpack.c.b8 %v322, %v321
    %v324 = vpack.c.b16 %v206, %v202
    %v325 = vpack.c.b16 %v214, %v210
    %v326 = vpack.c.b8 %v325, %v324
    %v327 = vpack.c.b16 %v219, %v215
    %v328 = vpack.c.b16 %v227, %v223
    %v329 = vpack.c.b8 %v328, %v327
    %v330 = vpack.c.b16 %v220, %v216
    %v331 = vpack.c.b16 %v228, %v224
    %v332 = vpack.c.b8 %v331, %v330
    %v333 = vpack.c.b16 %v221, %v217
    %v334 = vpack.c.b16 %v229, %v225
    %v335 = vpack.c.b8 %v334, %v333
    %v336 = vpack.c.b16 %v222, %v218
    %v337 = vpack.c.b16 %v230, %v226
    %v338 = vpack.c.b8 %v337, %v336
    %v339 = vpack.c.b16 %v235, %v231
    %v340 = vpack.c.b16 %v243, %v239
    %v341 = vpack.c.b8 %v340, %v339
    %v342 = vpack.c.b16 %v236, %v232
    %v343 = vpack.c.b16 %v244, %v240
    %v344 = vpack.c.b8 %v343, %v342
    %v345 = vpack.c.b16 %v237, %v233
    %v346 = vpack.c.b16 %v245, %v241
    %v347 = vpack.c.b8 %v346, %v345
    %v348 = vpack.c.b16 %v238, %v234
    %v349 = vpack.c.b16 %v246, %v242
    %v350 = vpack.c.b8 %v349, %v348
    %v351 = vpack.c.b16 %v251, %v247
    %v352 = vpack.c.b16 %v259, %v255
    %v353 = vpack.c.b8 %v352, %v351
    %v354 = vpack.c.b16 %v252, %v248
    %v355 = vpack.c.b16 %v260, %v256
    %v356 = vpack.c.b8 %v355, %v354
    %v357 = vpack.c.b16 %v253, %v249
    %v358 = vpack.c.b16 %v261, %v257
    %v359 = vpack.c.b8 %v358, %v357
    %v360 = vpack.c.b16 %v254, %v250
    %v361 = vpack.c.b16 %v262, %v258
    %v362 = vpack.c.b8 %v361, %v360
    %v363 = vpack.c.b16 %v267, %v263
    %v364 = vpack.c.b16 %v275, %v271
    %v365 = vpack.c.b8 %v364, %v363
    %v366 = vpack.c.b16 %v268, %v264
    %v367 = vpack.c.b16 %v276, %v272
    %v368 = vpack.c.b8 %v367, %v366
    %v369 = vpack.c.b16 %v269, %v265
    %v370 = vpack.c.b16 %v277, %v273
    %v371 = vpack.c.b8 %v370, %v369
    %v372 = vpack.c.b16 %v270, %v266
    %v373 = vpack.c.b16 %v278, %v274
    %v374 = vpack.c.b8 %v373, %v372
    %375 = vst [vmem:[#allocation5] sm:$0xff] %v281
    %376 = vst [vmem:[#allocation5 + $0x8] sm:$0xff] %v284
    %377 = vst [vmem:[#allocation5 + $0x10] sm:$0xff] %v287
    %378 = vst [vmem:[#allocation5 + $0x18] sm:$0xff] %v290
    %379 = vst [vmem:[#allocation5 + $0x20] sm:$0xff] %v293
    %380 = vst [vmem:[#allocation5 + $0x28] sm:$0xff] %v296
    %381 = vst [vmem:[#allocation5 + $0x30] sm:$0xff] %v299
    %382 = vst [vmem:[#allocation5 + $0x38] sm:$0xff] %v302
    %383 = vst [vmem:[#allocation5 + $0x40] sm:$0xff] %v305
    %384 = vst [vmem:[#allocation5 + $0x48] sm:$0xff] %v308
    %385 = vst [vmem:[#allocation5 + $0x50] sm:$0xff] %v311
    %386 = vst [vmem:[#allocation5 + $0x58] sm:$0xff] %v314
    %387 = vst [vmem:[#allocation5 + $0x60] sm:$0xff] %v317
    %388 = vst [vmem:[#allocation5 + $0x68] sm:$0xff] %v320
    %389 = vst [vmem:[#allocation5 + $0x70] sm:$0xff] %v323
    %390 = vst [vmem:[#allocation5 + $0x78] sm:$0xff] %v326
    %391 = vst [vmem:[#allocation5 + $0x80] sm:$0xff] %v329
    %392 = vst [vmem:[#allocation5 + $0x88] sm:$0xff] %v332
    %393 = vst [vmem:[#allocation5 + $0x90] sm:$0xff] %v335
    %394 = vst [vmem:[#allocation5 + $0x98] sm:$0xff] %v338
    %395 = vst [vmem:[#allocation5 + $0xa0] sm:$0xff] %v341
    %396 = vst [vmem:[#allocation5 + $0xa8] sm:$0xff] %v344
    %397 = vst [vmem:[#allocation5 + $0xb0] sm:$0xff] %v347
    %398 = vst [vmem:[#allocation5 + $0xb8] sm:$0xff] %v350
    %399 = vst [vmem:[#allocation5 + $0xc0] sm:$0xff] %v353
    %400 = vst [vmem:[#allocation5 + $0xc8] sm:$0xff] %v356
    %401 = vst [vmem:[#allocation5 + $0xd0] sm:$0xff] %v359
    %402 = vst [vmem:[#allocation5 + $0xd8] sm:$0xff] %v362
    %403 = vst [vmem:[#allocation5 + $0xe0] sm:$0xff] %v365
    %404 = vst [vmem:[#allocation5 + $0xe8] sm:$0xff] %v368
    %405 = vst [vmem:[#allocation5 + $0xf0] sm:$0xff] %v371
    %406 = vst [vmem:[#allocation5 + $0xf8] sm:$0xff] %v374
    // Predicated region
    $region10: #{tpu_custom_call.1} parent=1 // pred_check
      _
    $region11: #{tpu_custom_call.1} parent=1 // pred_check_branch
      %408 = sbr.rel (0) target = $region13
    $region12: #{tpu_custom_call.1} parent=1 // pred_region
      %s410 = ssub.s32 4096, 4096
      %411 = vsyncadd [#allocation4], %s410
      %s412 = sshll.u32 [#allocation5], 4
      %s413 = int_to_ptr.vmem [resolvable:$true] %s412
      %418 = dma.vmem_to_hbm [thread:$0]  %s413, 4096, %s1, [#allocation4], 512, 512, 32
    $region13: #{tpu_custom_call.1} parent=1 // pred_fallthru
      _
    // Predicated region
    $region14: #{tpu_custom_call.1} parent=1 // pred_check
      _
    $region15: #{tpu_custom_call.1} parent=1 // pred_check_branch
      %420 = sbr.rel (0) target = $region17
    $region16: #{tpu_custom_call.1} parent=1 // pred_region
      %421 = dma.done [#allocation4], 4096
    $region17: #{tpu_custom_call.1} parent=1 // pred_fallthru
      _
    %422 = vsyncpa [#allocation3], 1
    %423 = vsyncpa [#allocation4], 1

</llo_original>
